<compile_context>
chip_gen: v7x
topology: tpu7x:2x2x1
jax: 0.10.0
libtpu: 0.0.40
codegen_flags: <defaults>
</compile_context>

<pallas_src>
import functools

import jax
import jax.numpy as jnp
from jax.experimental import pallas as pl
from jax.experimental.pallas import tpu as pltpu


# ----------------------------------------------------------------------------
# Fused ContextBlock kernel: one block = Nb batch samples
# ----------------------------------------------------------------------------
def _context_block_kernel(x_ref, wm_ref, w1_ref, pgb_ref, w2b_ref, out_ref, *,
                          eps, hw_valid):
    nb, C, HWp = x_ref.shape
    P = w1_ref.shape[0]

    x = x_ref[...].astype(jnp.float32)                     # (nb, C, HWp) f32
    wm = wm_ref[...]                                        # (1, C)

    # ---- spatial_pool ('att'): per-sample softmax attention + pooling -----
    ctx_cols = []
    for n in range(nb):                                     # static, nb small
        xn = x[n]                                           # (C, HWp)
        logits = jnp.dot(wm, xn,
                         preferred_element_type=jnp.float32)      # (1, HWp)
        if hw_valid < HWp:                                  # mask pad lanes
            col = jax.lax.broadcasted_iota(jnp.int32, (1, HWp), 1)
            logits = jnp.where(col < hw_valid, logits, -1e30)
        m = jnp.max(logits, axis=-1, keepdims=True)
        e = jnp.exp(logits - m)
        p = e / jnp.sum(e, axis=-1, keepdims=True)          # exact divide
        # attention-weighted channel pooling on the MXU:
        # (C, HWp) x (1, HWp), contracting HWp -> (C, 1)
        ctx = jax.lax.dot_general(xn, p, (((1,), (1,)), ((), ())),
                                  preferred_element_type=jnp.float32)
        ctx_cols.append(ctx)
    ctx_mat = ctx_cols[0] if nb == 1 else jnp.concatenate(ctx_cols, axis=1)

    # ---- channel_add_conv: conv1 -> LayerNorm -> ReLU -> conv2, batched ----
    b1 = pgb_ref[:, 0:1]                                    # (P, 1)
    gamma = pgb_ref[:, 1:2]                                 # (P, 1)
    beta = pgb_ref[:, 2:3]                                  # (P, 1)
    h = jnp.dot(w1_ref[...], ctx_mat,
                preferred_element_type=jnp.float32) + b1    # (P, nb)
    mu = jnp.mean(h, axis=0, keepdims=True)                 # (1, nb)
    var = jnp.mean((h - mu) ** 2, axis=0, keepdims=True)    # (1, nb)
    hhat = (h - mu) * jax.lax.rsqrt(var + eps)
    h = jnp.maximum(gamma * hhat + beta, 0.0)               # (P, nb)
    add = jnp.dot(w2b_ref[:, 0:P], h,
                  preferred_element_type=jnp.float32) + w2b_ref[:, P:P + 1]

    # ---- out = x + channel_add_term, broadcast over spatial lanes ----------
    for n in range(nb):
        out_ref[n] = (x[n] + add[:, n:n + 1]).astype(out_ref.dtype)


# ----------------------------------------------------------------------------
# Wrapper
# ----------------------------------------------------------------------------
def context_block_forward(x_nchw, w_mask, b_mask, w1, b1, ln_gamma, ln_beta,
                          w2, b2, *, eps=1e-5, block_batch=None):
    """ContextBlock forward (pooling_type='att', fusion=('channel_add',)).

    I/O dtype follows x (pass bf16 x to halve HBM traffic); compute is f32.
    NOTE: b_mask is accepted for API parity but dropped — softmax is shift
    invariant, so adding a scalar bias before it is an exact no-op.
    """
    del b_mask  # exact no-op under softmax
    N, C, H, W = x_nchw.shape
    HW = H * W
    P = w1.shape[0]
    io_dtype = x_nchw.dtype
    itemsize = jnp.dtype(io_dtype).itemsize

    # Lane-align the spatial dim (multiple of 128) -> unmasked stores.
    HW_pad = max(128, ((HW + 127) // 128) * 128)

    # Samples per block: amortize per-step overhead, keep >=2 grid steps
    # (v7x megacore), bound live VMEM (in+out double-buffered ~ 4x block).
    if block_batch is None:
        per_sample = C * HW_pad * itemsize
        nb_vmem = max(1, int((24 << 20) // (4 * per_sample)))
        target_steps = min(N, 4) if N > 1 else 1
        nb_steps = max(1, N // target_steps)
        nb = max(1, min(nb_vmem, nb_steps, 16))
    else:
        nb = max(1, min(int(block_batch), N, 16))

    n_steps = -(-N // nb)
    N_pad = n_steps * nb

    x_flat = x_nchw.reshape(N, C, HW)                       # no transpose
    if N_pad != N or HW_pad != HW:
        x_flat = jnp.pad(x_flat, ((0, N_pad - N), (0, 0), (0, HW_pad - HW)))

    f32 = jnp.float32
    wm = w_mask.reshape(1, C).astype(f32)                   # conv_mask weight
    w1_f = w1.astype(f32)                                   # (P, C)
    pgb = jnp.stack([b1.reshape(P), ln_gamma.reshape(P),
                     ln_beta.reshape(P)], axis=1).astype(f32)        # (P, 3)
    w2b = jnp.concatenate([w2.astype(f32),
                           b2.reshape(C, 1).astype(f32)], axis=1)    # (C,P+1)

    blk_bytes = nb * C * HW_pad * itemsize
    vmem_limit = int(min(max(4 * blk_bytes + (4 << 20), 16 << 20), 48 << 20))

    kernel = functools.partial(_context_block_kernel, eps=eps, hw_valid=HW)

    out = pl.pallas_call(
        kernel,
        out_shape=jax.ShapeDtypeStruct((N_pad, C, HW_pad), io_dtype),
        grid=(n_steps,),
        in_specs=[
            pl.BlockSpec((nb, C, HW_pad), lambda i: (i, 0, 0)),   # x
            pl.BlockSpec((1, C), lambda i: (0, 0)),               # conv_mask W
            pl.BlockSpec((P, C), lambda i: (0, 0)),               # conv1 W
            pl.BlockSpec((P, 3), lambda i: (0, 0)),               # [b1|g|b]
            pl.BlockSpec((C, P + 1), lambda i: (0, 0)),           # [w2|b2]
        ],
        out_specs=pl.BlockSpec((nb, C, HW_pad), lambda i: (i, 0, 0)),
        input_output_aliases={0: 0},                              # reuse x HBM
        compiler_params=pltpu.CompilerParams(
            dimension_semantics=("parallel",),
            vmem_limit_bytes=vmem_limit),
    )(x_flat, wm, w1_f, pgb, w2b)

    return out[:N, :, :HW].reshape(N, C, H, W)


# ----------------------------------------------------------------------------
# Pure-JAX reference (correctness check only)
# ----------------------------------------------------------------------------
def context_block_reference(x, w_mask, b_mask, w1, b1, ln_gamma, ln_beta,
                            w2, b2, *, eps=1e-5):
    N, C, H, W = x.shape
    xs = x.reshape(N, C, H * W).astype(jnp.float32)
    logits = jnp.einsum('ncs,c->ns', xs, w_mask.reshape(C)) + b_mask
    p = jax.nn.softmax(logits, axis=-1)                     # (N, HW)
    context = jnp.einsum('ncs,ns->nc', xs, p)               # (N, C)
    h = context @ w1.T + b1                                 # (N, P)
    mu = h.mean(axis=-1, keepdims=True)
    var = ((h - mu) ** 2).mean(axis=-1, keepdims=True)
    h = (h - mu) / jnp.sqrt(var + eps)
    h = jnp.maximum(ln_gamma * h + ln_beta, 0.0)
    add = h @ w2.T + b2                                     # (N, C)
    return xs.reshape(N, C, H, W) + add[:, :, None, None]


if __name__ == "__main__":
    # ContextBlock(inplanes=32, ratio=0.25) -> planes=8, pooling_type='att',
    # fusion_types=('channel_add',)
    N, C, H, W = 2, 32, 16, 16
    ratio = 0.25
    P = int(C * ratio)
    eps = 1e-5

    key = jax.random.PRNGKey(0)
    ks = jax.random.split(key, 10)
    x = jax.random.normal(ks[0], (N, C, H, W), jnp.float32)

    w_mask = jax.random.normal(ks[1], (1, C), jnp.float32) / jnp.sqrt(C)
    b_mask = 0.1 * jax.random.normal(ks[2], (), jnp.float32)
    w1 = jax.random.normal(ks[3], (P, C), jnp.float32) / jnp.sqrt(C)
    b1 = 0.1 * jax.random.normal(ks[4], (P,), jnp.float32)
    ln_gamma = 1.0 + 0.1 * jax.random.normal(ks[5], (P,), jnp.float32)
    ln_beta = 0.1 * jax.random.normal(ks[6], (P,), jnp.float32)
    w2 = jax.random.normal(ks[7], (C, P), jnp.float32) / jnp.sqrt(P)
    b2 = 0.1 * jax.random.normal(ks[8], (C,), jnp.float32)
    params = (w_mask, b_mask, w1, b1, ln_gamma, ln_beta, w2, b2)

    # 1) f32, lane-aligned spatial (16*16 = 256), auto block batching.
    out = jax.block_until_ready(context_block_forward(x, *params, eps=eps))
    ref = context_block_reference(x, *params, eps=eps)
    assert out.shape == (N, C, H, W), out.shape
    err1 = float(jnp.max(jnp.abs(out - ref)))
    assert jnp.allclose(out, ref, rtol=1e-3, atol=1e-3), err1

    # 2) Non-lane-aligned spatial (7*7 = 49 -> padded to 128), odd batch with
    #    multi-sample blocks (block_batch=2 -> batch padded 5 -> 6).
    x2 = jax.random.normal(ks[9], (5, C, 7, 7), jnp.float32)
    out2 = jax.block_until_ready(
        context_block_forward(x2, *params, eps=eps, block_batch=2))
    ref2 = context_block_reference(x2, *params, eps=eps)
    err2 = float(jnp.max(jnp.abs(out2 - ref2)))
    assert jnp.allclose(out2, ref2, rtol=1e-3, atol=1e-3), err2

    # 3) bf16 I/O path (halved HBM traffic); compute stays f32 in-kernel.
    xb = x.astype(jnp.bfloat16)
    out3 = jax.block_until_ready(context_block_forward(xb, *params, eps=eps))
    assert out3.dtype == jnp.bfloat16
    ref3 = context_block_reference(xb.astype(jnp.float32), *params, eps=eps)
    err3 = float(jnp.max(jnp.abs(out3.astype(jnp.float32) - ref3)))
    assert jnp.allclose(out3.astype(jnp.float32), ref3,
                        rtol=5e-2, atol=5e-2), err3

    print("KERNEL_OK")
</pallas_src>

<mosaic_0001>
module attributes {stable_mosaic.version = 11 : i64} {
  func.func @_context_block_kernel(%arg0: i32, %arg1: memref<1x32x256xf32, #tpu.memory_space<vmem>>, %arg2: memref<1x32xf32, #tpu.memory_space<vmem>>, %arg3: memref<8x32xf32, #tpu.memory_space<vmem>>, %arg4: memref<8x3xf32, #tpu.memory_space<vmem>>, %arg5: memref<32x9xf32, #tpu.memory_space<vmem>>, %arg6: memref<1x32x256xf32, #tpu.memory_space<vmem>>) attributes {dimension_semantics = [#tpu.dimension_semantics<parallel>], iteration_bounds = array<i64: 2>, scalar_prefetch = 0 : i64, scratch_operands = 0 : i64, tpu.core_type = #tpu.core_type<tc>, window_params = [{transform_indices = @transform_0, window_bounds = array<i64: 1, 32, 256>}, {pipeline_mode = #tpu.pipeline_mode<synchronous>, transform_indices = @transform_1, window_bounds = array<i64: 1, 32>}, {pipeline_mode = #tpu.pipeline_mode<synchronous>, transform_indices = @transform_2, window_bounds = array<i64: 8, 32>}, {pipeline_mode = #tpu.pipeline_mode<synchronous>, transform_indices = @transform_3, window_bounds = array<i64: 8, 3>}, {pipeline_mode = #tpu.pipeline_mode<synchronous>, transform_indices = @transform_4, window_bounds = array<i64: 32, 9>}, {transform_indices = @transform_5, window_bounds = array<i64: 1, 32, 256>}]} {
    %c0 = arith.constant 0 : index
    %c0_0 = arith.constant 0 : index
    %c0_1 = arith.constant 0 : index
    %0 = vector.load %arg1[%c0, %c0_0, %c0_1] : memref<1x32x256xf32, #tpu.memory_space<vmem>>, vector<1x32x256xf32>
    %c0_2 = arith.constant 0 : index
    %c0_3 = arith.constant 0 : index
    %1 = vector.load %arg2[%c0_2, %c0_3] : memref<1x32xf32, #tpu.memory_space<vmem>>, vector<1x32xf32>
    %2 = vector.shape_cast %0 : vector<1x32x256xf32> to vector<32x256xf32>
    %cst = arith.constant dense<0.000000e+00> : vector<1x256xf32>
    %3 = tpu.matmul %1, %2, %cst {dimension_numbers = #tpu.dot_dimension_numbers<[1], [0], [0], [1], [0, 0, 1, 1], [], []>} : vector<1x32xf32>, vector<32x256xf32>, vector<1x256xf32> -> vector<1x256xf32>
    %cst_4 = arith.constant dense<0xFF800000> : vector<1xf32>
    %4 = vector.multi_reduction <maximumf>, %3, %cst_4 [1] : vector<1x256xf32> to vector<1xf32>
    %5 = vector.shape_cast %4 : vector<1xf32> to vector<1x1xf32>
    %6 = vector.broadcast %5 : vector<1x1xf32> to vector<1x256xf32>
    %7 = arith.subf %3, %6 : vector<1x256xf32>
    %8 = math.exp %7 : vector<1x256xf32>
    %cst_5 = arith.constant dense<0.000000e+00> : vector<1xf32>
    %9 = vector.multi_reduction <add>, %8, %cst_5 [1] : vector<1x256xf32> to vector<1xf32>
    %10 = vector.shape_cast %9 : vector<1xf32> to vector<1x1xf32>
    %11 = vector.broadcast %10 : vector<1x1xf32> to vector<1x256xf32>
    %12 = arith.divf %8, %11 : vector<1x256xf32>
    %cst_6 = arith.constant dense<0.000000e+00> : vector<32x1xf32>
    %13 = tpu.matmul %2, %12, %cst_6 {dimension_numbers = #tpu.dot_dimension_numbers<[1], [1], [0], [0], [0, 0, 1, 0], [], []>} : vector<32x256xf32>, vector<1x256xf32>, vector<32x1xf32> -> vector<32x1xf32>
    %c0_7 = arith.constant 0 : index
    %c0_8 = arith.constant 0 : index
    %14 = vector.load %arg4[%c0_7, %c0_8] : memref<8x3xf32, #tpu.memory_space<vmem>>, vector<8x1xf32>
    %c0_9 = arith.constant 0 : index
    %c1 = arith.constant 1 : index
    %15 = vector.load %arg4[%c0_9, %c1] : memref<8x3xf32, #tpu.memory_space<vmem>>, vector<8x1xf32>
    %c0_10 = arith.constant 0 : index
    %c2 = arith.constant 2 : index
    %16 = vector.load %arg4[%c0_10, %c2] : memref<8x3xf32, #tpu.memory_space<vmem>>, vector<8x1xf32>
    %c0_11 = arith.constant 0 : index
    %c0_12 = arith.constant 0 : index
    %17 = vector.load %arg3[%c0_11, %c0_12] : memref<8x32xf32, #tpu.memory_space<vmem>>, vector<8x32xf32>
    %cst_13 = arith.constant dense<0.000000e+00> : vector<8x1xf32>
    %18 = tpu.matmul %17, %13, %cst_13 {dimension_numbers = #tpu.dot_dimension_numbers<[1], [0], [0], [1], [0, 0, 1, 1], [], []>} : vector<8x32xf32>, vector<32x1xf32>, vector<8x1xf32> -> vector<8x1xf32>
    %19 = arith.addf %18, %14 : vector<8x1xf32>
    %cst_14 = arith.constant dense<0.000000e+00> : vector<1xf32>
    %20 = vector.multi_reduction <add>, %19, %cst_14 [0] : vector<8x1xf32> to vector<1xf32>
    %21 = vector.shape_cast %20 : vector<1xf32> to vector<1x1xf32>
    %cst_15 = arith.constant 8.000000e+00 : f32
    %22 = vector.broadcast %cst_15 : f32 to vector<1x1xf32>
    %23 = arith.divf %21, %22 : vector<1x1xf32>
    %24 = vector.broadcast %23 : vector<1x1xf32> to vector<8x1xf32>
    %25 = arith.subf %19, %24 : vector<8x1xf32>
    %26 = arith.mulf %25, %25 : vector<8x1xf32>
    %cst_16 = arith.constant dense<0.000000e+00> : vector<1xf32>
    %27 = vector.multi_reduction <add>, %26, %cst_16 [0] : vector<8x1xf32> to vector<1xf32>
    %28 = vector.shape_cast %27 : vector<1xf32> to vector<1x1xf32>
    %cst_17 = arith.constant 8.000000e+00 : f32
    %29 = vector.broadcast %cst_17 : f32 to vector<1x1xf32>
    %30 = arith.divf %28, %29 : vector<1x1xf32>
    %31 = vector.broadcast %23 : vector<1x1xf32> to vector<8x1xf32>
    %32 = arith.subf %19, %31 : vector<8x1xf32>
    %cst_18 = arith.constant 9.99999974E-6 : f32
    %33 = vector.broadcast %cst_18 : f32 to vector<1x1xf32>
    %34 = arith.addf %30, %33 : vector<1x1xf32>
    %35 = math.rsqrt %34 : vector<1x1xf32>
    %36 = vector.broadcast %35 : vector<1x1xf32> to vector<8x1xf32>
    %37 = arith.mulf %32, %36 : vector<8x1xf32>
    %38 = arith.mulf %15, %37 : vector<8x1xf32>
    %39 = arith.addf %38, %16 : vector<8x1xf32>
    %cst_19 = arith.constant 0.000000e+00 : f32
    %40 = vector.broadcast %cst_19 : f32 to vector<8x1xf32>
    %41 = arith.maximumf %39, %40 : vector<8x1xf32>
    %c0_20 = arith.constant 0 : index
    %c0_21 = arith.constant 0 : index
    %42 = vector.load %arg5[%c0_20, %c0_21] : memref<32x9xf32, #tpu.memory_space<vmem>>, vector<32x8xf32>
    %cst_22 = arith.constant dense<0.000000e+00> : vector<32x1xf32>
    %43 = tpu.matmul %42, %41, %cst_22 {dimension_numbers = #tpu.dot_dimension_numbers<[1], [0], [0], [1], [0, 0, 1, 1], [], []>} : vector<32x8xf32>, vector<8x1xf32>, vector<32x1xf32> -> vector<32x1xf32>
    %c0_23 = arith.constant 0 : index
    %c8 = arith.constant 8 : index
    %44 = vector.load %arg5[%c0_23, %c8] : memref<32x9xf32, #tpu.memory_space<vmem>>, vector<32x1xf32>
    %45 = arith.addf %43, %44 : vector<32x1xf32>
    %46 = vector.shape_cast %0 : vector<1x32x256xf32> to vector<32x256xf32>
    %47 = vector.broadcast %45 : vector<32x1xf32> to vector<32x256xf32>
    %48 = arith.addf %46, %47 : vector<32x256xf32>
    %c0_24 = arith.constant 0 : index
    %c0_25 = arith.constant 0 : index
    %c0_26 = arith.constant 0 : index
    %49 = vector.load %arg6[%c0_24, %c0_25, %c0_26] : memref<1x32x256xf32, #tpu.memory_space<vmem>>, vector<1x32x256xf32>
    %50 = vector.shape_cast %49 : vector<1x32x256xf32> to vector<32x256xf32>
    %51 = vector.shape_cast %48 : vector<32x256xf32> to vector<1x32x256xf32>
    tpu.vector_store %arg6[%c0_24, %c0_25, %c0_26], %51 {strides = array<i32>} : memref<1x32x256xf32, #tpu.memory_space<vmem>>, vector<1x32x256xf32>,
    return
  }
  func.func @transform_0(%arg0: i32) -> (i32, i32, i32) {
    %c0_i32 = arith.constant 0 : i32
    %c0_i32_0 = arith.constant 0 : i32
    %c0_i32_1 = arith.constant 0 : i32
    return %arg0, %c0_i32, %c0_i32_0 : i32, i32, i32
  }
  func.func @transform_1(%arg0: i32) -> (i32, i32) {
    %c0_i32 = arith.constant 0 : i32
    %c0_i32_0 = arith.constant 0 : i32
    %c0_i32_1 = arith.constant 0 : i32
    return %c0_i32, %c0_i32_0 : i32, i32
  }
  func.func @transform_2(%arg0: i32) -> (i32, i32) {
    %c0_i32 = arith.constant 0 : i32
    %c0_i32_0 = arith.constant 0 : i32
    %c0_i32_1 = arith.constant 0 : i32
    return %c0_i32, %c0_i32_0 : i32, i32
  }
  func.func @transform_3(%arg0: i32) -> (i32, i32) {
    %c0_i32 = arith.constant 0 : i32
    %c0_i32_0 = arith.constant 0 : i32
    %c0_i32_1 = arith.constant 0 : i32
    return %c0_i32, %c0_i32_0 : i32, i32
  }
  func.func @transform_4(%arg0: i32) -> (i32, i32) {
    %c0_i32 = arith.constant 0 : i32
    %c0_i32_0 = arith.constant 0 : i32
    %c0_i32_1 = arith.constant 0 : i32
    return %c0_i32, %c0_i32_0 : i32, i32
  }
  func.func @transform_5(%arg0: i32) -> (i32, i32, i32) {
    %c0_i32 = arith.constant 0 : i32
    %c0_i32_0 = arith.constant 0 : i32
    %c0_i32_1 = arith.constant 0 : i32
    return %arg0, %c0_i32, %c0_i32_0 : i32, i32, i32
  }
}

</mosaic_0001>

<llo_original>
// kernel: tpu_custom_call.1
$region0: #{tpu_custom_call.1}
  #allocation0 [shape = 'u32[]', space=smem, size = 0x4, offset = 0x4, fixed_abs, tag = 'smem constant byte address 0x4 - core index']
  #allocation1 [shape = 'u32[144,128]{1,0:T(1,128)}', space=vmem, size = 0x12000, scoped, tag = 'internal scratch']
  %s0 = inlined_call_operand.hbm [shape: f32[2,32,256], index: 0, kind: input, shape index: {}, may-alias: {0,5}]
  %s1 = inlined_call_operand.vmem [shape: f32[1,32], index: 1, kind: input, shape index: {}]
  %s2 = inlined_call_operand.vmem [shape: f32[8,32], index: 2, kind: input, shape index: {}]
  %s3 = inlined_call_operand.vmem [shape: f32[8,3], index: 3, kind: input, shape index: {}]
  %s4 = inlined_call_operand.vmem [shape: f32[32,9], index: 4, kind: input, shape index: {}]
  %s5 = inlined_call_operand.hbm [shape: f32[2,32,256], index: 5, kind: output, shape index: {}, may-alias: {0,5}]
  %s6 = sld [smem:[#allocation0]]
  $region57: #{tpu_custom_call.1} parent=0
    _
  %s8 = ssub.s32 1, %s6
  %s9 = scalar_select 0, %s8, %s6
  $region1: #{tpu_custom_call.1} parent=0
    #allocation2 [shape = 'u8[65536]{0}', space=vmem, size = 0x10000, scoped, tag = 'input window, operand 0']
    #allocation3 [shape = 's32[2]{0}', space=sflag, size = 0x8, scoped, tag = 'scoped memory for tpu_custom_call.1']
    #allocation4 [shape = 's32[2]{0}', space=sflag, size = 0x8, scoped, tag = 'scoped memory for tpu_custom_call.1']
    #allocation5 [shape = 'u8[65536]{0}', space=vmem, size = 0x10000, scoped, tag = 'output window, operand 0']
    %10 = vsyncpa [#allocation3], 0
    %s11 = scalar_lea.sflag [#allocation3], 1
    %12 = vsyncpa %s11, 0
    %13 = vsyncpa [#allocation4], 0
    %s14 = scalar_lea.sflag [#allocation4], 1
    %15 = vsyncpa %s14, 0
    loop: start=0, step=1, limit=4
    $region2: #{tpu_custom_call.1} parent=1 // loop_pre_header
      _
    $region3: #{tpu_custom_call.1} parent=1 // loop_header
      %s17 = sphi 0, %s21
      %p18 = scmp.ge.s32.totalorder %s17, 4
      %s27 = sphi 0, %s29
      %s30 = sphi 0, %s27
      %s31 = sphi 0, %s30
      %s47 = sphi 0, %s31
      %s51 = sphi 0, %s51
      %s53 = sphi 0, %s51
      %s54 = sphi 0, %s53
      %s68 = sphi 0, %s54
      %s72 = sphi 0, %s72
      %s74 = sphi 0, %s72
      %s75 = sphi 0, %s74
      %s89 = sphi 0, %s75
      %s93 = sphi 0, %s93
      %s95 = sphi 0, %s93
      %s96 = sphi 0, %s95
      %s110 = sphi 0, %s96
      %s114 = sphi 0, %s114
      %s116 = sphi 0, %s114
      %s117 = sphi 0, %s116
      %s131 = sphi 0, %s117
      %s137 = sphi 0, %s139
      %s140 = sphi 0, %s137
      %s141 = sphi 0, %s140
      %s157 = sphi 0, %s141
    $region4: #{tpu_custom_call.1} parent=1 // loop_header_branch
      %20 = sbr.rel (%p18) target = $region8
    $region5: #{tpu_custom_call.1} parent=1 // loop_body
      %s22 = ssub.s32 %s17, 1
      %s23 = ssub.s32 %s17, 2
      %s24 = sadd.s32 %s17, 1
      %s25 = ssub.s32 %s17, %s24
      %p26 = scmp.eq.s32.totalorder %s25, 0
      %s28 = sadd.s32 %s27, 1
      %s29 = scalar_select %p26, %s27, %s28
      %p32 = pneg %p26
      %p33 = scmp.eq.s32.totalorder %s17, 1
      %p34 = por %p32, %p33
      %p35 = scmp.ne.s32.totalorder %s27, %s30
      %p36 = scmp.eq.s32.totalorder %s17, 0
      %p37 = por %p35, %p36
      %p38 = scmp.ne.s32.totalorder %s27, %s30
      %p39 = scmp.eq.s32.totalorder %s22, 1
      %p40 = por %p38, %p39
      %p41 = scmp.ne.s32.totalorder %s30, %s31
      %p42 = scmp.eq.s32.totalorder %s22, 0
      %p43 = por %p41, %p42
      %p44 = scmp.ne.s32.totalorder %s30, %s31
      %p45 = scmp.eq.s32.totalorder %s23, 1
      %p46 = por %p44, %p45
      %p48 = scmp.ne.s32.totalorder %s31, %s47
      %p49 = scmp.eq.s32.totalorder %s23, 0
      %p50 = por %p48, %p49
      %s52 = sadd.s32 %s51, 1
      %p55 = scmp.eq.s32.totalorder %s17, 1
      %p56 = scmp.ne.s32.totalorder %s51, %s53
      %p57 = scmp.eq.s32.totalorder %s17, 0
      %p58 = por %p56, %p57
      %p59 = scmp.ne.s32.totalorder %s51, %s53
      %p60 = scmp.eq.s32.totalorder %s22, 1
      %p61 = por %p59, %p60
      %p62 = scmp.ne.s32.totalorder %s53, %s54
      %p63 = scmp.eq.s32.totalorder %s22, 0
      %p64 = por %p62, %p63
      %p65 = scmp.ne.s32.totalorder %s53, %s54
      %p66 = scmp.eq.s32.totalorder %s23, 1
      %p67 = por %p65, %p66
      %p69 = scmp.ne.s32.totalorder %s54, %s68
      %p70 = scmp.eq.s32.totalorder %s23, 0
      %p71 = por %p69, %p70
      %s73 = sadd.s32 %s72, 1
      %p76 = scmp.eq.s32.totalorder %s17, 1
      %p77 = scmp.ne.s32.totalorder %s72, %s74
      %p78 = scmp.eq.s32.totalorder %s17, 0
      %p79 = por %p77, %p78
      %p80 = scmp.ne.s32.totalorder %s72, %s74
      %p81 = scmp.eq.s32.totalorder %s22, 1
      %p82 = por %p80, %p81
      %p83 = scmp.ne.s32.totalorder %s74, %s75
      %p84 = scmp.eq.s32.totalorder %s22, 0
      %p85 = por %p83, %p84
      %p86 = scmp.ne.s32.totalorder %s74, %s75
      %p87 = scmp.eq.s32.totalorder %s23, 1
      %p88 = por %p86, %p87
      %p90 = scmp.ne.s32.totalorder %s75, %s89
      %p91 = scmp.eq.s32.totalorder %s23, 0
      %p92 = por %p90, %p91
      %s94 = sadd.s32 %s93, 1
      %p97 = scmp.eq.s32.totalorder %s17, 1
      %p98 = scmp.ne.s32.totalorder %s93, %s95
      %p99 = scmp.eq.s32.totalorder %s17, 0
      %p100 = por %p98, %p99
      %p101 = scmp.ne.s32.totalorder %s93, %s95
      %p102 = scmp.eq.s32.totalorder %s22, 1
      %p103 = por %p101, %p102
      %p104 = scmp.ne.s32.totalorder %s95, %s96
      %p105 = scmp.eq.s32.totalorder %s22, 0
      %p106 = por %p104, %p105
      %p107 = scmp.ne.s32.totalorder %s95, %s96
      %p108 = scmp.eq.s32.totalorder %s23, 1
      %p109 = por %p107, %p108
      %p111 = scmp.ne.s32.totalorder %s96, %s110
      %p112 = scmp.eq.s32.totalorder %s23, 0
      %p113 = por %p111, %p112
      %s115 = sadd.s32 %s114, 1
      %p118 = scmp.eq.s32.totalorder %s17, 1
      %p119 = scmp.ne.s32.totalorder %s114, %s116
      %p120 = scmp.eq.s32.totalorder %s17, 0
      %p121 = por %p119, %p120
      %p122 = scmp.ne.s32.totalorder %s114, %s116
      %p123 = scmp.eq.s32.totalorder %s22, 1
      %p124 = por %p122, %p123
      %p125 = scmp.ne.s32.totalorder %s116, %s117
      %p126 = scmp.eq.s32.totalorder %s22, 0
      %p127 = por %p125, %p126
      %p128 = scmp.ne.s32.totalorder %s116, %s117
      %p129 = scmp.eq.s32.totalorder %s23, 1
      %p130 = por %p128, %p129
      %p132 = scmp.ne.s32.totalorder %s117, %s131
      %p133 = scmp.eq.s32.totalorder %s23, 0
      %p134 = por %p132, %p133
      %s135 = ssub.s32 %s17, %s24
      %p136 = scmp.eq.s32.totalorder %s135, 0
      %s138 = sadd.s32 %s137, 1
      %s139 = scalar_select %p136, %s137, %s138
      %p142 = pneg %p136
      %p143 = scmp.eq.s32.totalorder %s17, 1
      %p144 = por %p142, %p143
      %p145 = scmp.ne.s32.totalorder %s137, %s140
      %p146 = scmp.eq.s32.totalorder %s17, 0
      %p147 = por %p145, %p146
      %p148 = scmp.ne.s32.totalorder %s137, %s140
      %p149 = scmp.eq.s32.totalorder %s22, 1
      %p150 = por %p148, %p149
      %p151 = scmp.ne.s32.totalorder %s140, %s141
      %p152 = scmp.eq.s32.totalorder %s22, 0
      %p153 = por %p151, %p152
      %p154 = scmp.ne.s32.totalorder %s140, %s141
      %p155 = scmp.eq.s32.totalorder %s23, 1
      %p156 = por %p154, %p155
      %p158 = scmp.ne.s32.totalorder %s141, %s157
      %p159 = scmp.eq.s32.totalorder %s23, 0
      %p160 = por %p158, %p159
      %p161 = scmp.le.s32.totalorder 1, %s17
      %p162 = scmp.lt.s32.totalorder %s17, 3
      %p163 = pnand %p161, %p162
      %p164 = pneg %p163
      // Predicated region
      $region9: #{tpu_custom_call.1} parent=5 // pred_check
        _
      $region10: #{tpu_custom_call.1} parent=5 // pred_check_branch
        %166 = sbr.rel (%p163) target = $region12
      $region11: #{tpu_custom_call.1} parent=5 // pred_region
        %s167 = ssub.s32 %s17, 1
        // Predicated region
        $region13: #{tpu_custom_call.1} parent=11 // pred_check
          %p168 = pneg %p64
        $region14: #{tpu_custom_call.1} parent=11 // pred_check_branch
          %170 = sbr.rel (%p168) target = $region16
        $region15: #{tpu_custom_call.1} parent=11 // pred_region
          _
        $region16: #{tpu_custom_call.1} parent=11 // pred_fallthru
          _
        // Predicated region
        $region17: #{tpu_custom_call.1} parent=11 // pred_check
          %p171 = pneg %p85
        $region18: #{tpu_custom_call.1} parent=11 // pred_check_branch
          %173 = sbr.rel (%p171) target = $region20
        $region19: #{tpu_custom_call.1} parent=11 // pred_region
          _
        $region20: #{tpu_custom_call.1} parent=11 // pred_fallthru
          _
        // Predicated region
        $region21: #{tpu_custom_call.1} parent=11 // pred_check
          %p174 = pneg %p106
        $region22: #{tpu_custom_call.1} parent=11 // pred_check_branch
          %176 = sbr.rel (%p174) target = $region24
        $region23: #{tpu_custom_call.1} parent=11 // pred_region
          _
        $region24: #{tpu_custom_call.1} parent=11 // pred_fallthru
          _
        // Predicated region
        $region25: #{tpu_custom_call.1} parent=11 // pred_check
          %p177 = pneg %p127
        $region26: #{tpu_custom_call.1} parent=11 // pred_check_branch
          %179 = sbr.rel (%p177) target = $region28
        $region27: #{tpu_custom_call.1} parent=11 // pred_region
          _
        $region28: #{tpu_custom_call.1} parent=11 // pred_fallthru
          _
      $region12: #{tpu_custom_call.1} parent=5 // pred_fallthru
        _
      %p180 = scmp.lt.s32.totalorder %s17, 2
      // Predicated region
      $region29: #{tpu_custom_call.1} parent=5 // pred_check
        %p181 = pneg %p180
      $region30: #{tpu_custom_call.1} parent=5 // pred_check_branch
        %183 = sbr.rel (%p181) target = $region32
      $region31: #{tpu_custom_call.1} parent=5 // pred_region
        // Predicated region
        $region33: #{tpu_custom_call.1} parent=31 // pred_check
          %p184 = pneg %p37
        $region34: #{tpu_custom_call.1} parent=31 // pred_check_branch
          %186 = sbr.rel (%p184) target = $region36
        $region35: #{tpu_custom_call.1} parent=31 // pred_region
          %s187 = sand.u32 %s27, 1
          %s188 = scalar_lea.sflag [#allocation3], %s187
          %s189 = sand.u32 %s27, 1
          %s190 = smul.addr %s189, 64
          %s191 = scalar_lea.vmem [#allocation2], %s190
          %s193 = ssub.s32 1024, 1024
          %194 = vsyncadd %s188, %s193
          %s195 = smul.addr %s17, 8
          %s196 = smul.addr %s195, 128
          %s197 = scalar_lea.hbm %s0, %s196
          %s198 = sshll.u32 %s191, 4
          %s199 = int_to_ptr.vmem [resolvable:$true] %s198
          %204 = dma.hbm_to_vmem [thread:$0]  %s197, 1024, %s199, %s188, 256, 256, 16
        $region36: #{tpu_custom_call.1} parent=31 // pred_fallthru
          _
      $region32: #{tpu_custom_call.1} parent=5 // pred_fallthru
        _
      %p205 = scmp.le.s32.totalorder 1, %s17
      %p206 = scmp.lt.s32.totalorder %s17, 3
      %p207 = pnand %p205, %p206
      %p208 = pneg %p207
      // Predicated region
      $region37: #{tpu_custom_call.1} parent=5 // pred_check
        _
      $region38: #{tpu_custom_call.1} parent=5 // pred_check_branch
        %210 = sbr.rel (%p207) target = $region40
      $region39: #{tpu_custom_call.1} parent=5 // pred_region
        %s211 = ssub.s32 %s17, 1
        %s212 = sand.u32 %s30, 1
        %s213 = scalar_lea.sflag [#allocation3], %s212
        %s214 = sand.u32 %s30, 1
        %s215 = smul.addr %s214, 64
        %s216 = scalar_lea.vmem [#allocation2], %s215
        // Predicated region
        $region41: #{tpu_custom_call.1} parent=39 // pred_check
          %p217 = pneg %p43
        $region42: #{tpu_custom_call.1} parent=39 // pred_check_branch
          %219 = sbr.rel (%p217) target = $region44
        $region43: #{tpu_custom_call.1} parent=39 // pred_region
          %220 = dma.done %s213, 1024
        $region44: #{tpu_custom_call.1} parent=39 // pred_fallthru
          _
        %s221 = sand.u32 %s30, 1
        %s222 = scalar_lea.sflag [#allocation3], %s221
        %s223 = sand.u32 %s30, 1
        %s224 = smul.addr %s223, 64
        %s225 = scalar_lea.vmem [#allocation2], %s224
        %p226 = pneg %p43
        %p227 = pneg %p40
        %p228 = pneg %p64
        %p229 = pneg %p61
        %p230 = pneg %p85
        %p231 = pneg %p82
        %p232 = pneg %p106
        %p233 = pneg %p103
        %p234 = pneg %p127
        %p235 = pneg %p124
        %p236 = pneg %p153
        %p237 = pneg %p150
        %s238 = sand.u32 %s140, 1
        %s239 = scalar_lea.sflag [#allocation4], %s238
        %s240 = sand.u32 %s140, 1
        %s241 = smul.addr %s240, 64
        %s242 = scalar_lea.vmem [#allocation5], %s241
        %v243 = vld [vmem:[%s216] sm:$0xff]
        %v244 = vld [vmem:[%s216 + $0x8] sm:$0xff]
        %v245 = vld [vmem:[%s216 + $0x10] sm:$0xff]
        %v246 = vld [vmem:[%s216 + $0x18] sm:$0xff]
        %v247 = vld [vmem:[%s216 + $0x20] sm:$0xff]
        %v248 = vld [vmem:[%s216 + $0x28] sm:$0xff]
        %v249 = vld [vmem:[%s216 + $0x30] sm:$0xff]
        %v250 = vld [vmem:[%s216 + $0x38] sm:$0xff]
        %v251 = vld [vmem:[%s1] sm:$0x1]
        %vm252 = vcmask 261120
        %v254 = vsel %vm252, %v251, 0
        %256 = vmatprep.subr.mxu0 %v244
        %257 = vmatpush1.msra.mxu0 %v243
        %258 = vmatprep.subr.mxu0 %v246
        %259 = vmatpush1.msra.mxu0 %v245
        %260 = vmatprep.subr.mxu0 %v248
        %261 = vmatpush1.msra.mxu0 %v247
        %262 = vmatprep.subr.mxu0 %v250
        %263 = vmatpush1.msra.mxu0 %v249
        %264 = vmatprep.subr.mxu0 0.0
        %265 = vmatpush1.msra.mxu0 0.0
        %266 = vmatprep.subr.mxu0 0.0
        %267 = vmatpush1.msra.mxu0 0.0
        %268 = vmatprep.subr.mxu0 0.0
        %269 = vmatpush1.msra.mxu0 0.0
        %270 = vmatprep.subr.mxu0 0.0
        %271 = vmatpush1.msra.mxu0 0.0
        %272 = vmatprep.subr.mxu0 0.0
        %273 = vmatpush1.msra.mxu0 0.0
        %274 = vmatprep.subr.mxu0 0.0
        %275 = vmatpush1.msra.mxu0 0.0
        %276 = vmatprep.subr.mxu0 0.0
        %277 = vmatpush1.msra.mxu0 0.0
        %278 = vmatprep.subr.mxu0 0.0
        %279 = vmatpush1.msra.mxu0 0.0
        %280 = vmatprep.subr.mxu0 0.0
        %281 = vmatpush1.msra.mxu0 0.0
        %282 = vmatprep.subr.mxu0 0.0
        %283 = vmatpush1.msra.mxu0 0.0
        %284 = vmatprep.subr.mxu0 0.0
        %285 = vmatpush1.msra.mxu0 0.0
        %286 = vmatprep.subr.mxu0 0.0
        %287 = vmatpush1.msra.mxu0 0.0
        %288 = vmatprep.subr.mxu0 0.0
        %289 = vmatpush1.msra.mxu0 0.0
        %290 = vmatprep.subr.mxu0 0.0
        %291 = vmatpush1.msra.mxu0 0.0
        %292 = vmatprep.subr.mxu0 0.0
        %293 = vmatpush1.msra.mxu0 0.0
        %294 = vmatprep.subr.mxu0 0.0
        %295 = vmatpush1.msra.mxu0 0.0
        %296 = vmatprep.subr.mxu0 0.0
        %297 = vmatpush1.msra.mxu0 0.0
        %298 = vmatprep.subr.mxu0 0.0
        %299 = vmatpush1.msra.mxu0 0.0
        %300 = vmatprep.subr.mxu0 0.0
        %301 = vmatpush1.msra.mxu0 0.0
        %302 = vmatprep.subr.mxu0 0.0
        %303 = vmatpush1.msra.mxu0 0.0
        %304 = vmatprep.subr.mxu0 0.0
        %305 = vmatpush1.msra.mxu0 0.0
        %306 = vmatprep.subr.mxu0 0.0
        %307 = vmatpush1.msra.mxu0 0.0
        %308 = vmatprep.subr.mxu0 0.0
        %309 = vmatpush1.msra.mxu0 0.0
        %310 = vmatprep.subr.mxu0 0.0
        %311 = vmatpush1.msra.mxu0 0.0
        %312 = vmatprep.subr.mxu0 0.0
        %313 = vmatpush1.msra.mxu0 0.0
        %314 = vmatprep.subr.mxu0 0.0
        %315 = vmatpush1.msra.mxu0 0.0
        %316 = vmatprep.subr.mxu0 0.0
        %317 = vmatpush1.msra.mxu0 0.0
        %318 = vmatprep.subr.mxu0 0.0
        %319 = vmatpush1.msra.mxu0 0.0
        %320 = vmatprep.mubr.f32.mxu0 0.0
        %321 = vmatmul.mubr.f32.gmra.mrb[0].mxu0 %v254
        %v322 = vpop.f32.mrb[0].mxu0
        %v323 = vadd.f32 0.0, %v322
        %v324 = vpop.f32.mrb[0].mxu0
        %v325 = vadd.f32 0.0, %v324
        %326 = vdwg.mxu0
        %vm327 = vcmask 1040384
        %v328 = vsel %vm327, %v323, -inf
        %v329 = vsel %vm327, %v325, -inf
        %v330 = vmax.f32 %v328, %v329
        %331 = vmax.xlane.f32.xlu0 %v330
        %v332 = vpop.xlane.xlu0 %331
        %v333 = vsub.f32 %v323, %v332
        %v334 = vsub.f32 %v325, %v332
        %v335 = vmul.f32 %v333, 1.442695
        %v336 = vpow.pop %v335
        %v337 = vmul.f32 %v334, 1.442695
        %v338 = vpow.pop %v337
        %v339 = vsel %vm327, %v336, 0.0
        %v340 = vsel %vm327, %v338, 0.0
        %v341 = vadd.f32 %v339, %v340
        %342 = vadd.xlane.f32.xlu0 %v341
        %v343 = vpop.xlane.xlu0 %342
        %v344 = vrcp.pop %v343
        %v345 = vmul.f32 %v336, %v344
        %v346 = vmul.f32 %v338, %v344
        %v347 = vlaneseq
        %v348 = vshrl.u32 %v347, 7
        %v349 = vsub.s32 0, %v348
        %v350 = vrot.slane %v345, %v349
        %v351 = vlaneseq
        %v352 = vshrl.u32 %v351, 7
        %v353 = vsub.s32 0, %v352
        %v354 = vrot.slane %v346, %v353
        %v355 = vmul.f32 %v243, %v350
        %v356 = vmul.f32 %v244, %v354
        %v357 = vmul.f32 %v245, %v350
        %v358 = vmul.f32 %v246, %v354
        %v359 = vmul.f32 %v247, %v350
        %v360 = vmul.f32 %v248, %v354
        %v361 = vmul.f32 %v249, %v350
        %v362 = vmul.f32 %v250, %v354
        %v363 = vadd.f32 %v355, %v356
        %364 = vadd.xlane.f32.xlu0 %v363
        %v365 = vpop.xlane.xlu0 %364
        %v366 = vadd.f32 %v357, %v358
        %367 = vadd.xlane.f32.xlu0 %v366
        %v368 = vpop.xlane.xlu0 %367
        %v369 = vadd.f32 %v359, %v360
        %370 = vadd.xlane.f32.xlu0 %v369
        %v371 = vpop.xlane.xlu0 %370
        %v372 = vadd.f32 %v361, %v362
        %373 = vadd.xlane.f32.xlu0 %v372
        %v374 = vpop.xlane.xlu0 %373
        %v375 = vld [vmem:[%s3] sm:$0xff]
        %v376 = vld [vmem:[%s2] sm:$0xff]
        %v378 = vsel %vm252, %v376, 0
        %380 = vmatprep.subr.mxu0 0.0
        %381 = vmatpush1.msra.mxu0 %v365
        %382 = vmatprep.subr.mxu0 0.0
        %383 = vmatpush1.msra.mxu0 %v368
        %384 = vmatprep.subr.mxu0 0.0
        %385 = vmatpush1.msra.mxu0 %v371
        %386 = vmatprep.subr.mxu0 0.0
        %387 = vmatpush1.msra.mxu0 %v374
        %388 = vmatprep.subr.mxu0 0.0
        %389 = vmatpush1.msra.mxu0 0.0
        %390 = vmatprep.subr.mxu0 0.0
        %391 = vmatpush1.msra.mxu0 0.0
        %392 = vmatprep.subr.mxu0 0.0
        %393 = vmatpush1.msra.mxu0 0.0
        %394 = vmatprep.subr.mxu0 0.0
        %395 = vmatpush1.msra.mxu0 0.0
        %396 = vmatprep.subr.mxu0 0.0
        %397 = vmatpush1.msra.mxu0 0.0
        %398 = vmatprep.subr.mxu0 0.0
        %399 = vmatpush1.msra.mxu0 0.0
        %400 = vmatprep.subr.mxu0 0.0
        %401 = vmatpush1.msra.mxu0 0.0
        %402 = vmatprep.subr.mxu0 0.0
        %403 = vmatpush1.msra.mxu0 0.0
        %404 = vmatprep.subr.mxu0 0.0
        %405 = vmatpush1.msra.mxu0 0.0
        %406 = vmatprep.subr.mxu0 0.0
        %407 = vmatpush1.msra.mxu0 0.0
        %408 = vmatprep.subr.mxu0 0.0
        %409 = vmatpush1.msra.mxu0 0.0
        %410 = vmatprep.subr.mxu0 0.0
        %411 = vmatpush1.msra.mxu0 0.0
        %412 = vmatprep.subr.mxu0 0.0
        %413 = vmatpush1.msra.mxu0 0.0
        %414 = vmatprep.subr.mxu0 0.0
        %415 = vmatpush1.msra.mxu0 0.0
        %416 = vmatprep.subr.mxu0 0.0
        %417 = vmatpush1.msra.mxu0 0.0
        %418 = vmatprep.subr.mxu0 0.0
        %419 = vmatpush1.msra.mxu0 0.0
        %420 = vmatprep.subr.mxu0 0.0
        %421 = vmatpush1.msra.mxu0 0.0
        %422 = vmatprep.subr.mxu0 0.0
        %423 = vmatpush1.msra.mxu0 0.0
        %424 = vmatprep.subr.mxu0 0.0
        %425 = vmatpush1.msra.mxu0 0.0
        %426 = vmatprep.subr.mxu0 0.0
        %427 = vmatpush1.msra.mxu0 0.0
        %428 = vmatprep.subr.mxu0 0.0
        %429 = vmatpush1.msra.mxu0 0.0
        %430 = vmatprep.subr.mxu0 0.0
        %431 = vmatpush1.msra.mxu0 0.0
        %432 = vmatprep.subr.mxu0 0.0
        %433 = vmatpush1.msra.mxu0 0.0
        %434 = vmatprep.subr.mxu0 0.0
        %435 = vmatpush1.msra.mxu0 0.0
        %436 = vmatprep.subr.mxu0 0.0
        %437 = vmatpush1.msra.mxu0 0.0
        %438 = vmatprep.subr.mxu0 0.0
        %439 = vmatpush1.msra.mxu0 0.0
        %440 = vmatprep.subr.mxu0 0.0
        %441 = vmatpush1.msra.mxu0 0.0
        %442 = vmatprep.subr.mxu0 0.0
        %443 = vmatpush1.msra.mxu0 0.0
        %444 = vmatprep.mubr.f32.mxu0 0.0
        %445 = vmatmul.mubr.f32.gmra.mrb[0].mxu0 %v378
        %v446 = vpop.f32.mrb[0].mxu0
        %v447 = vadd.f32 %v375, %v446
        %v448 = vpop.f32.mrb[0].mxu0
        %449 = vdwg.mxu0
        %vm450 = vcmask 7168
        %v451 = vsel %vm450, %v447, 0.0
        %v452 = vrot.slane %v451, 4
        %v453 = vadd.f32 %v451, %v452
        %v454 = vrot.slane %v453, 2
        %v455 = vadd.f32 %v453, %v454
        %v456 = vrot.slane %v455, 1
        %v457 = vadd.f32 %v455, %v456
        %v458 = vrcp.pop 8.0
        %v459 = vmul.f32 %v457, %v458
        %v460 = vsub.f32 %v447, %v459
        %v461 = vmul.f32 %v460, %v460
        %v462 = vsel %vm450, %v461, 0.0
        %v463 = vrot.slane %v462, 4
        %v464 = vadd.f32 %v462, %v463
        %v465 = vrot.slane %v464, 2
        %v466 = vadd.f32 %v464, %v465
        %v467 = vrot.slane %v466, 1
        %v468 = vadd.f32 %v466, %v467
        %v469 = vmul.f32 %v468, %v458
        %v470 = vadd.f32 %v469, 1e-05
        %v471 = vrsqrt.pop %v470
        %v472 = vmul.f32 %v460, %v471
        %474 = vrot.lane.b32.xlu0 %v472, 1
        %v475 = vpop.permute.xlu0 %474
        %v477 = vmul.f32 %v375, %v475
        %479 = vrot.lane.b32.xlu0 %v375, 127
        %v480 = vpop.permute.xlu0 %479
        %v482 = vadd.f32 %v477, %v480
        %v483 = vmax.f32 %v482, 0.0
        %v484 = vld [vmem:[%s4] sm:$0xff]
        %v485 = vld [vmem:[%s4 + $0x8] sm:$0xff]
        %v486 = vld [vmem:[%s4 + $0x10] sm:$0xff]
        %v487 = vld [vmem:[%s4 + $0x18] sm:$0xff]
        %489 = vrot.lane.b32.xlu0 %v483, 127
        %v490 = vpop.permute.xlu0 %489
        %496 = vrot.lane.b32.xlu0 %v484, 120
        %v497 = vpop.permute.xlu0 %496
        %498 = vrot.lane.b32.xlu0 %v485, 120
        %v499 = vpop.permute.xlu0 %498
        %500 = vrot.lane.b32.xlu0 %v486, 120
        %v501 = vpop.permute.xlu0 %500
        %502 = vrot.lane.b32.xlu0 %v487, 120
        %v503 = vpop.permute.xlu0 %502
        %vm508 = vcmask 64512
        %v509 = vsel %vm508, %v484, 0
        %v511 = vsel %vm508, %v485, 0
        %v513 = vsel %vm508, %v486, 0
        %v515 = vsel %vm508, %v487, 0
        %517 = vmatprep.subr.mxu0 0.0
        %518 = vmatpush1.msra.mxu0 %v490
        %519 = vmatprep.subr.mxu0 0.0
        %520 = vmatpush1.msra.mxu0 0.0
        %521 = vmatprep.subr.mxu0 0.0
        %522 = vmatpush1.msra.mxu0 0.0
        %523 = vmatprep.subr.mxu0 0.0
        %524 = vmatpush1.msra.mxu0 0.0
        %525 = vmatprep.subr.mxu0 0.0
        %526 = vmatpush1.msra.mxu0 0.0
        %527 = vmatprep.subr.mxu0 0.0
        %528 = vmatpush1.msra.mxu0 0.0
        %529 = vmatprep.subr.mxu0 0.0
        %530 = vmatpush1.msra.mxu0 0.0
        %531 = vmatprep.subr.mxu0 0.0
        %532 = vmatpush1.msra.mxu0 0.0
        %533 = vmatprep.subr.mxu0 0.0
        %534 = vmatpush1.msra.mxu0 0.0
        %535 = vmatprep.subr.mxu0 0.0
        %536 = vmatpush1.msra.mxu0 0.0
        %537 = vmatprep.subr.mxu0 0.0
        %538 = vmatpush1.msra.mxu0 0.0
        %539 = vmatprep.subr.mxu0 0.0
        %540 = vmatpush1.msra.mxu0 0.0
        %541 = vmatprep.subr.mxu0 0.0
        %542 = vmatpush1.msra.mxu0 0.0
        %543 = vmatprep.subr.mxu0 0.0
        %544 = vmatpush1.msra.mxu0 0.0
        %545 = vmatprep.subr.mxu0 0.0
        %546 = vmatpush1.msra.mxu0 0.0
        %547 = vmatprep.subr.mxu0 0.0
        %548 = vmatpush1.msra.mxu0 0.0
        %549 = vmatprep.subr.mxu0 0.0
        %550 = vmatpush1.msra.mxu0 0.0
        %551 = vmatprep.subr.mxu0 0.0
        %552 = vmatpush1.msra.mxu0 0.0
        %553 = vmatprep.subr.mxu0 0.0
        %554 = vmatpush1.msra.mxu0 0.0
        %555 = vmatprep.subr.mxu0 0.0
        %556 = vmatpush1.msra.mxu0 0.0
        %557 = vmatprep.subr.mxu0 0.0
        %558 = vmatpush1.msra.mxu0 0.0
        %559 = vmatprep.subr.mxu0 0.0
        %560 = vmatpush1.msra.mxu0 0.0
        %561 = vmatprep.subr.mxu0 0.0
        %562 = vmatpush1.msra.mxu0 0.0
        %563 = vmatprep.subr.mxu0 0.0
        %564 = vmatpush1.msra.mxu0 0.0
        %565 = vmatprep.subr.mxu0 0.0
        %566 = vmatpush1.msra.mxu0 0.0
        %567 = vmatprep.subr.mxu0 0.0
        %568 = vmatpush1.msra.mxu0 0.0
        %569 = vmatprep.subr.mxu0 0.0
        %570 = vmatpush1.msra.mxu0 0.0
        %571 = vmatprep.subr.mxu0 0.0
        %572 = vmatpush1.msra.mxu0 0.0
        %573 = vmatprep.subr.mxu0 0.0
        %574 = vmatpush1.msra.mxu0 0.0
        %575 = vmatprep.subr.mxu0 0.0
        %576 = vmatpush1.msra.mxu0 0.0
        %577 = vmatprep.subr.mxu0 0.0
        %578 = vmatpush1.msra.mxu0 0.0
        %579 = vmatprep.subr.mxu0 0.0
        %580 = vmatpush1.msra.mxu0 0.0
        %581 = vmatprep.mubr.f32.mxu0 0.0
        %582 = vmatmul.mubr.f32.gmra.mrb[0].mxu0 %v509
        %v583 = vpop.f32.mrb[0].mxu0
        %v584 = vadd.f32 %v497, %v583
        %v585 = vpop.f32.mrb[0].mxu0
        %586 = vmatprep.mubr.f32.mxu0 0.0
        %587 = vmatmul.mubr.f32.gmra.mrb[0].mxu0 %v511
        %v588 = vpop.f32.mrb[0].mxu0
        %v589 = vadd.f32 %v499, %v588
        %v590 = vpop.f32.mrb[0].mxu0
        %591 = vmatprep.mubr.f32.mxu0 0.0
        %592 = vmatmul.mubr.f32.gmra.mrb[0].mxu0 %v513
        %v593 = vpop.f32.mrb[0].mxu0
        %v594 = vadd.f32 %v501, %v593
        %v595 = vpop.f32.mrb[0].mxu0
        %596 = vmatprep.mubr.f32.mxu0 0.0
        %597 = vmatmul.mubr.f32.gmra.mrb[0].mxu0 %v515
        %v598 = vpop.f32.mrb[0].mxu0
        %v599 = vadd.f32 %v503, %v598
        %v600 = vpop.f32.mrb[0].mxu0
        %601 = vdwg.mxu0
        %603 = vset.pattern.permute.xlu0 0
        %604 = vperm.xlu0 %603, %v584
        %v605 = vpop.permute.xlu0 %604
        %608 = vset.pattern.permute.xlu0 0
        %609 = vperm.xlu0 %608, %v589
        %v610 = vpop.permute.xlu0 %609
        %613 = vset.pattern.permute.xlu0 0
        %614 = vperm.xlu0 %613, %v594
        %v615 = vpop.permute.xlu0 %614
        %618 = vset.pattern.permute.xlu0 0
        %619 = vperm.xlu0 %618, %v599
        %v620 = vpop.permute.xlu0 %619
        %v622 = vadd.f32 %v243, %v605
        %v623 = vadd.f32 %v244, %v605
        %v624 = vadd.f32 %v245, %v610
        %v625 = vadd.f32 %v246, %v610
        %v626 = vadd.f32 %v247, %v615
        %v627 = vadd.f32 %v248, %v615
        %v628 = vadd.f32 %v249, %v620
        %v629 = vadd.f32 %v250, %v620
        %630 = vst [vmem:[%s242] sm:$0xff] %v622
        %631 = vst [vmem:[%s242 + $0x8] sm:$0xff] %v623
        %632 = vst [vmem:[%s242 + $0x10] sm:$0xff] %v624
        %633 = vst [vmem:[%s242 + $0x18] sm:$0xff] %v625
        %634 = vst [vmem:[%s242 + $0x20] sm:$0xff] %v626
        %635 = vst [vmem:[%s242 + $0x28] sm:$0xff] %v627
        %636 = vst [vmem:[%s242 + $0x30] sm:$0xff] %v628
        %637 = vst [vmem:[%s242 + $0x38] sm:$0xff] %v629
        %s638 = sand.u32 %s140, 1
        %s639 = scalar_lea.sflag [#allocation4], %s638
        %s640 = sand.u32 %s140, 1
        %s641 = smul.addr %s640, 64
        %s642 = scalar_lea.vmem [#allocation5], %s641
        // Predicated region
        $region45: #{tpu_custom_call.1} parent=39 // pred_check
          %p643 = pneg %p150
        $region46: #{tpu_custom_call.1} parent=39 // pred_check_branch
          %645 = sbr.rel (%p643) target = $region48
        $region47: #{tpu_custom_call.1} parent=39 // pred_region
          %s647 = ssub.s32 1024, 1024
          %648 = vsyncadd %s639, %s647
          %s649 = smul.addr %s22, 8
          %s650 = smul.addr %s649, 128
          %s651 = scalar_lea.hbm %s5, %s650
          %s652 = sshll.u32 %s642, 4
          %s653 = int_to_ptr.vmem [resolvable:$true] %s652
          %658 = dma.vmem_to_hbm [thread:$0]  %s653, 1024, %s651, %s639, 256, 256, 16
        $region48: #{tpu_custom_call.1} parent=39 // pred_fallthru
          _
      $region40: #{tpu_custom_call.1} parent=5 // pred_fallthru
        _
      %p659 = scmp.le.s32.totalorder 2, %s17
      // Predicated region
      $region49: #{tpu_custom_call.1} parent=5 // pred_check
        %p660 = pneg %p659
      $region50: #{tpu_custom_call.1} parent=5 // pred_check_branch
        %662 = sbr.rel (%p660) target = $region52
      $region51: #{tpu_custom_call.1} parent=5 // pred_region
        %s663 = ssub.s32 %s17, 2
        // Predicated region
        $region53: #{tpu_custom_call.1} parent=51 // pred_check
          %p664 = pneg %p156
        $region54: #{tpu_custom_call.1} parent=51 // pred_check_branch
          %666 = sbr.rel (%p664) target = $region56
        $region55: #{tpu_custom_call.1} parent=51 // pred_region
          %s667 = sand.u32 %s141, 1
          %s668 = scalar_lea.sflag [#allocation4], %s667
          %s669 = sand.u32 %s141, 1
          %s670 = smul.addr %s669, 64
          %s671 = scalar_lea.vmem [#allocation5], %s670
          %672 = dma.done %s668, 1024
        $region56: #{tpu_custom_call.1} parent=51 // pred_fallthru
          _
      $region52: #{tpu_custom_call.1} parent=5 // pred_fallthru
        _
    $region6: #{tpu_custom_call.1} parent=1 // loop_footer
      %s21 = sadd.s32 1, %s17
    $region7: #{tpu_custom_call.1} parent=1 // loop_footer_branch
      %16 = sbr.rel target = $region3
    $region8: #{tpu_custom_call.1} parent=1 // loop_exit
      _
    %673 = vsyncpa [#allocation3], 1
    %s674 = scalar_lea.sflag [#allocation3], 1
    %675 = vsyncpa %s674, 1
    %676 = vsyncpa [#allocation4], 1
    %s677 = scalar_lea.sflag [#allocation4], 1
    %678 = vsyncpa %s677, 1

</llo_original>
